<compile_context>
chip_gen: v7x
topology: tpu7x:2x2x1
jax: 0.10.0
libtpu: 0.0.40
codegen_flags: <defaults>
</compile_context>

<pallas_src>
import jax
import jax.numpy as jnp
from jax.experimental import pallas as pl
from jax.experimental.pallas import tpu as pltpu


def _copy_kernel(x_ref, o_ref):
    # Pure pass-through of the current (tm, lane) tile.
    o_ref[...] = x_ref[...]


def _sublane_step(itemsize):
    # Native packed tile heights: (8,128) f32, (16,128) bf16, (32,128) i8/fp8.
    return max(8, 32 // max(1, itemsize))


def _row_tile(rows, lane, itemsize, sub, max_block_bytes=2 * 1024 * 1024):
    """Multiple-of-`sub` row tile dividing `rows`, capped at ~2 MiB per block.

    2 MiB blocks keep the double-buffered footprint (~8 MiB) under every
    generation's scoped-VMEM default (v5e 16 MiB); on v7x one could raise the
    cap to 4-8 MiB (+ vmem_limit_bytes) for a few extra % of HBM roofline.
    """
    cap_rows = max(sub, (max_block_bytes // (lane * itemsize)) // sub * sub)
    if rows >= 2 * sub:
        # Ensure >= 2 grid steps so ("parallel",) actually splits across the
        # two TensorCores on v7x (neutral on single-TC v5e/v6e).
        cap_rows = min(cap_rows, max(sub, (rows // 2) // sub * sub))
    tm = min(rows, cap_rows)
    tm = max(sub, tm // sub * sub)
    while rows % tm != 0:   # rows is always a multiple of `sub` here
        tm -= sub
    return tm


def _pallas_clone(x):
    """Materialize `x.clone()` through a Pallas copy kernel (bandwidth-bound)."""
    orig_shape = x.shape
    flat = x.reshape(-1)
    total = flat.shape[0]
    itemsize = jnp.dtype(x.dtype).itemsize
    sub = _sublane_step(itemsize)

    # Widest lane (<=512, multiple of 128) that tiles `total`; prefer one that
    # also makes the row count a multiple of the sublane step (no padding).
    lane = 128
    for cand in (512, 256, 128):
        if total % (cand * sub) == 0:
            lane = cand
            break
    else:
        for cand in (512, 256, 128):
            if total % cand == 0:
                lane = cand
                break

    rows = pl.cdiv(total, lane)
    rows = ((rows + sub - 1) // sub) * sub          # sublane-aligned row count
    pad = rows * lane - total
    if pad:
        # Rare ragged case: pad instead of emitting one giant whole-array
        # block (which would defeat pipelining and could blow scoped VMEM).
        flat = jnp.pad(flat, (0, pad))
    x2 = flat.reshape(rows, lane)

    tm = _row_tile(rows, lane, itemsize, sub)

    out2 = pl.pallas_call(
        _copy_kernel,
        out_shape=jax.ShapeDtypeStruct((rows, lane), x.dtype),
        grid=(rows // tm,),
        in_specs=[pl.BlockSpec((tm, lane), lambda i: (i, 0))],
        out_specs=pl.BlockSpec((tm, lane), lambda i: (i, 0)),
        compiler_params=pltpu.CompilerParams(
            dimension_semantics=("parallel",),
        ),
        cost_estimate=pl.CostEstimate(
            flops=0,
            transcendentals=0,
            bytes_accessed=2 * rows * lane * itemsize,
        ),
    )(x2)

    out_flat = out2.reshape(-1)
    if pad:
        out_flat = out_flat[:total]
    return out_flat.reshape(orig_shape)


def print_layer_forward(x, y, *, materialize_clone=False):
    """Pallas/JAX equivalent of PrintLayer.forward.

    Args:
      x: jnp array of shape (B, N, C) with N == y[0] * y[1].
      y: tuple/list (H, W) of Python ints.
      materialize_clone: if True, actually materialize the (discarded)
        `d = x.clone()` through the Pallas copy kernel. Off by default: the
        forward is a pure identity, so the fastest implementation returns x.
    Returns:
      x (identity).
    """
    B, N, C = x.shape
    H, W = int(y[0]), int(y[1])

    # print(x.shape)  -- trace-time shape print.
    print((B, N, C))
    assert N == H * W, f"reshape invalid: N={N} != H*W={H * W}"
    # d = x.clone().reshape(B, C, H, W); print(d.shape); d is discarded.
    print((B, C, H, W))

    if materialize_clone:
        d = _pallas_clone(x)            # the module's `x.clone()`
        d = d.reshape(B, C, H, W)       # shape-validity only
        del d

    return x                            # identity: no HBM traffic on hot path


if __name__ == "__main__":
    key = jax.random.PRNGKey(0)
    B, H, W, C = 2, 4, 4, 32
    N = H * W
    x = jax.random.normal(key, (B, N, C), dtype=jnp.float32)
    y = (H, W)

    # Hot path: pure identity, no kernel.
    out_fast = jax.block_until_ready(print_layer_forward(x, y))
    assert out_fast.shape == (B, N, C) and out_fast.dtype == x.dtype
    assert bool(jnp.all(out_fast == x))

    # Exercise the Pallas clone kernel once (the module's `x.clone()`).
    d = jax.block_until_ready(_pallas_clone(x))
    assert d.shape == x.shape and d.dtype == x.dtype
    assert bool(jnp.all(d == x))

    # Forward with the clone materialized still returns x unchanged.
    out = jax.block_until_ready(print_layer_forward(x, y, materialize_clone=True))
    assert bool(jnp.all(out == x))

    print("KERNEL_OK")
</pallas_src>

<mosaic_0001>
module attributes {stable_mosaic.version = 11 : i64} {
  func.func @_copy_kernel(%arg0: i32, %arg1: memref<8x128xf32, #tpu.memory_space<vmem>>, %arg2: memref<8x128xf32, #tpu.memory_space<vmem>>) attributes {dimension_semantics = [#tpu.dimension_semantics<parallel>], iteration_bounds = array<i64: 1>, scalar_prefetch = 0 : i64, scratch_operands = 0 : i64, tpu.core_type = #tpu.core_type<tc>, window_params = [{transform_indices = @transform_0, window_bounds = array<i64: 8, 128>}, {transform_indices = @transform_1, window_bounds = array<i64: 8, 128>}]} {
    %c0 = arith.constant 0 : index
    %c0_0 = arith.constant 0 : index
    %0 = vector.load %arg1[%c0, %c0_0] : memref<8x128xf32, #tpu.memory_space<vmem>>, vector<8x128xf32>
    %c0_1 = arith.constant 0 : index
    %c0_2 = arith.constant 0 : index
    %1 = vector.load %arg2[%c0_1, %c0_2] : memref<8x128xf32, #tpu.memory_space<vmem>>, vector<8x128xf32>
    tpu.vector_store %arg2[%c0_1, %c0_2], %0 {strides = array<i32>} : memref<8x128xf32, #tpu.memory_space<vmem>>, vector<8x128xf32>,
    return
  }
  func.func @transform_0(%arg0: i32) -> (i32, i32) {
    %c0_i32 = arith.constant 0 : i32
    %c0_i32_0 = arith.constant 0 : i32
    return %arg0, %c0_i32 : i32, i32
  }
  func.func @transform_1(%arg0: i32) -> (i32, i32) {
    %c0_i32 = arith.constant 0 : i32
    %c0_i32_0 = arith.constant 0 : i32
    return %arg0, %c0_i32 : i32, i32
  }
}

</mosaic_0001>

<llo_original>
// kernel: tpu_custom_call.1
$region0: #{tpu_custom_call.1}
  #allocation0 [shape = 'u32[]', space=smem, size = 0x4, offset = 0x4, fixed_abs, tag = 'smem constant byte address 0x4 - core index']
  #allocation1 [shape = 'u32[144,128]{1,0:T(1,128)}', space=vmem, size = 0x12000, scoped, tag = 'internal scratch']
  %s0 = inlined_call_operand.hbm [shape: f32[8,128], index: 0, kind: input, shape index: {}]
  %s1 = inlined_call_operand.hbm [shape: f32[8,128], index: 1, kind: output, shape index: {}]
  %s2 = sld [smem:[#allocation0]]
  $region18: #{tpu_custom_call.1} parent=0
    _
  %s4 = ssub.s32 1, %s2
  %s5 = scalar_select 0, %s4, %s2
  $region1: #{tpu_custom_call.1} parent=0
    #allocation2 [shape = 'u8[4096]{0}', space=vmem, size = 0x1000, scoped, tag = 'input window, operand 0, single buffered']
    #allocation3 [shape = 's32[1]{0}', space=sflag, size = 0x4, scoped, tag = 'scoped memory for tpu_custom_call.1']
    #allocation4 [shape = 's32[1]{0}', space=sflag, size = 0x4, scoped, tag = 'scoped memory for tpu_custom_call.1']
    #allocation5 [shape = 'u8[4096]{0}', space=vmem, size = 0x1000, scoped, tag = 'output window, operand 0, single buffered']
    %6 = vsyncpa [#allocation3], 0
    %7 = vsyncpa [#allocation4], 0
    // Predicated region
    $region2: #{tpu_custom_call.1} parent=1 // pred_check
      _
    $region3: #{tpu_custom_call.1} parent=1 // pred_check_branch
      %9 = sbr.rel (0) target = $region5
    $region4: #{tpu_custom_call.1} parent=1 // pred_region
      %s11 = ssub.s32 128, 128
      %12 = vsyncadd [#allocation3], %s11
      %s14 = sshll.u32 [#allocation2], 4
      %s15 = int_to_ptr.vmem [resolvable:$true] %s14
      %17 = dma.hbm_to_vmem [thread:$0]  %s0, 128, %s15, [#allocation3]
    $region5: #{tpu_custom_call.1} parent=1 // pred_fallthru
      _
    // Predicated region
    $region6: #{tpu_custom_call.1} parent=1 // pred_check
      _
    $region7: #{tpu_custom_call.1} parent=1 // pred_check_branch
      %19 = sbr.rel (0) target = $region9
    $region8: #{tpu_custom_call.1} parent=1 // pred_region
      %20 = dma.done [#allocation3], 128
    $region9: #{tpu_custom_call.1} parent=1 // pred_fallthru
      _
    %v21 = vld [vmem:[#allocation2] sm:$0xff]
    %22 = vst [vmem:[#allocation5] sm:$0xff] %v21
    // Predicated region
    $region10: #{tpu_custom_call.1} parent=1 // pred_check
      _
    $region11: #{tpu_custom_call.1} parent=1 // pred_check_branch
      %24 = sbr.rel (0) target = $region13
    $region12: #{tpu_custom_call.1} parent=1 // pred_region
      %s26 = ssub.s32 128, 128
      %27 = vsyncadd [#allocation4], %s26
      %s29 = sshll.u32 [#allocation5], 4
      %s30 = int_to_ptr.vmem [resolvable:$true] %s29
      %32 = dma.vmem_to_hbm [thread:$0]  %s30, 128, %s1, [#allocation4]
    $region13: #{tpu_custom_call.1} parent=1 // pred_fallthru
      _
    // Predicated region
    $region14: #{tpu_custom_call.1} parent=1 // pred_check
      _
    $region15: #{tpu_custom_call.1} parent=1 // pred_check_branch
      %34 = sbr.rel (0) target = $region17
    $region16: #{tpu_custom_call.1} parent=1 // pred_region
      %35 = dma.done [#allocation4], 128
    $region17: #{tpu_custom_call.1} parent=1 // pred_fallthru
      _
    %36 = vsyncpa [#allocation3], 1
    %37 = vsyncpa [#allocation4], 1

</llo_original>
